<compile_context>
chip_gen: v6e
topology: v6e:2x2x1
jax: 0.10.0
libtpu: 0.0.40
codegen_flags: <defaults>
</compile_context>

<pallas_src>
import functools

import jax
import jax.numpy as jnp
from jax.experimental import pallas as pl
from jax.experimental.pallas import tpu as pltpu


def apinet_kernel(x_ref, w_apm_ref, b_apm_ref, w_reg_ref, b_reg_ref, out_ref,
                  *, tb, s):
    # x_ref:     (TB*S, F)  rows of TB consecutive sequences (pre-flattened)
    # w_apm_ref: (F, C)     APM logistic-regression weights (VMEM-resident)
    # b_apm_ref: (1, C)
    # w_reg_ref: (1, C)     Linear(C,1) weight, pre-transposed to a lane row
    # b_reg_ref: (1, 1)     SMEM scalar
    # out_ref:   (TB, 1)
    c = w_apm_ref.shape[1]

    # APM.predict_proba == softmax(x @ W_apm + b_apm); f32 accumulation on MXU.
    logits = jnp.dot(x_ref[...], w_apm_ref[...],
                     preferred_element_type=jnp.float32) + b_apm_ref[...]
    m = jnp.max(logits, axis=-1, keepdims=True)
    e = jnp.exp(logits - m)
    # Denominator reciprocal on the otherwise-idle EUP slot (~2^-12 rel err).
    probs = e * pl.reciprocal(jnp.sum(e, axis=-1, keepdims=True), approx=True)

    # Sum over the sequence axis.
    if tb == 1:
        # Single sequence per tile: plain sublane reduce, no reshape at all.
        team = jnp.sum(probs, axis=0, keepdims=True)             # (1, C)
    else:
        # Rows of one sequence are contiguous; with S a multiple of 8 this
        # sublane split is tile-aligned (layout-free) and the seq reduction
        # runs on the XLU.
        team = probs.reshape(tb, s, c).sum(axis=1)               # (TB, C)

    # regression_model = Linear(C, 1): VPU multiply + lane reduce instead of a
    # (TB,C)x(C,1) MXU pass (which would be pure fill/drain latency here).
    out = jnp.sum(team * w_reg_ref[...], axis=-1, keepdims=True) + b_reg_ref[0, 0]
    out_ref[...] = out.astype(out_ref.dtype)


def _pick_batch_tile(B, S, F, itemsize, target_rows=512, max_tile_bytes=4 << 20):
    """Sequences per grid step.  Aims for ~target_rows rows per tile, keeps the
    x tile (double-buffered by Pallas) under max_tile_bytes, requires TB | B,
    and keeps the (TB, 1) output block layout-legal (TB == B or TB % 8 == 0)."""
    bytes_per_seq = max(1, S * F * itemsize)
    cap_rows = max(1, target_rows // max(S, 1))
    cap_bytes = max(1, max_tile_bytes // bytes_per_seq)
    cap = max(1, min(B, cap_rows, cap_bytes))
    for tb in range(cap, 0, -1):
        if B % tb == 0 and (tb == B or tb % 8 == 0):
            return tb
    return B  # whole batch in one tile: block == full array is always legal


def apinet_forward(x, w_apm, b_apm, w_reg, b_reg, *, use_bf16=False):
    B, S, F = x.shape
    C = w_apm.shape[1]

    # ---- wrapper-side layout plumbing (free in XLA, keeps relayouts out of
    # ---- the kernel hot path) ----
    x_flat = x.reshape(B * S, F)            # flatten once, outside the kernel
    b_apm_row = b_apm.reshape(1, C)
    w_reg_row = w_reg.reshape(1, C)         # Linear(C,1) weight as a lane row
    b_reg_s = b_reg.reshape(1, 1)

    if use_bf16:
        # v6e/v7x: halves the x HBM->VMEM bytes; MXU still accumulates in f32.
        # Leave False on v5e (no bf16 VALU) or when tight tolerance is needed.
        x_flat = x_flat.astype(jnp.bfloat16)
        w_apm = w_apm.astype(jnp.bfloat16)

    tb = _pick_batch_tile(B, S, F, x_flat.dtype.itemsize)
    tm = tb * S
    grid = (B // tb,)

    kernel = functools.partial(apinet_kernel, tb=tb, s=S)

    flops = 2 * B * S * F * C + 6 * B * S * C + 2 * B * C
    transcendentals = B * S * C + B * S
    bytes_accessed = (
        x_flat.size * x_flat.dtype.itemsize
        + w_apm.size * w_apm.dtype.itemsize
        + (2 * C + 1) * 4          # b_apm, w_reg, b_reg
        + B * 4                    # output
    )

    return pl.pallas_call(
        kernel,
        out_shape=jax.ShapeDtypeStruct((B, 1), jnp.float32),
        grid=grid,
        in_specs=[
            pl.BlockSpec((tm, F), lambda i: (i, 0)),          # x rows, pipelined
            pl.BlockSpec((F, C), lambda i: (0, 0)),           # weights stay resident
            pl.BlockSpec((1, C), lambda i: (0, 0)),
            pl.BlockSpec((1, C), lambda i: (0, 0)),
            pl.BlockSpec(memory_space=pltpu.MemorySpace.SMEM),  # b_reg scalar
        ],
        out_specs=pl.BlockSpec((tb, 1), lambda i: (i, 0)),
        compiler_params=pltpu.CompilerParams(
            dimension_semantics=("parallel",),   # shards batch tiles across TCs (v7x)
        ),
        cost_estimate=pl.CostEstimate(
            flops=flops,
            transcendentals=transcendentals,
            bytes_accessed=bytes_accessed,
        ),
    )(x_flat, w_apm, b_apm_row, w_reg_row, b_reg_s)


def apinet_reference(x, w_apm, b_apm, w_reg, b_reg):
    B, S, F = x.shape
    logits = x.reshape(B * S, F) @ w_apm + b_apm
    probs = jax.nn.softmax(logits, axis=-1)
    team = probs.reshape(B, S, -1).sum(axis=1)
    return team @ w_reg + b_reg


if __name__ == "__main__":
    # Small shapes consistent with the forward: (batch, seq_len, feature_dim)
    B, S, F, C = 2, 8, 32, 4

    key = jax.random.PRNGKey(0)
    kx, kw1, kb1, kw2, kb2 = jax.random.split(key, 5)

    x = jax.random.normal(kx, (B, S, F), dtype=jnp.float32)

    # APM "predict_proba" parameters (logistic-regression head): (F, C), (1, C)
    # TODO(synk): APM is an arbitrary sklearn-style classifier in the original
    # module; only a softmax linear head has a clean in-kernel equivalent.
    w_apm = jax.random.normal(kw1, (F, C), dtype=jnp.float32) * 0.1
    b_apm = jax.random.normal(kb1, (1, C), dtype=jnp.float32) * 0.1

    # regression_model = Linear(C -> 1): (C, 1), (1, 1)
    w_reg = jax.random.normal(kw2, (C, 1), dtype=jnp.float32) * 0.1
    b_reg = jax.random.normal(kb2, (1, 1), dtype=jnp.float32) * 0.1

    out = jax.block_until_ready(apinet_forward(x, w_apm, b_apm, w_reg, b_reg))
    ref = apinet_reference(x, w_apm, b_apm, w_reg, b_reg)

    assert out.shape == (B, 1)
    # approx reciprocal (EUP vrcp) in the softmax loosens tolerance vs the
    # exact-f32 reference to ~1e-3 relative; well within 1e-2 here.
    assert jnp.allclose(out, ref, atol=1e-2, rtol=1e-2), (out, ref)

    print("KERNEL_OK")
</pallas_src>

<mosaic_0001>
module attributes {stable_mosaic.version = 11 : i64} {
  func.func @apinet_kernel(%arg0: i32, %arg1: memref<16x32xf32, #tpu.memory_space<vmem>>, %arg2: memref<32x4xf32, #tpu.memory_space<vmem>>, %arg3: memref<1x4xf32, #tpu.memory_space<vmem>>, %arg4: memref<1x4xf32, #tpu.memory_space<vmem>>, %arg5: memref<1x1xf32, #tpu.memory_space<smem>>, %arg6: memref<2x1xf32, #tpu.memory_space<vmem>>) attributes {dimension_semantics = [#tpu.dimension_semantics<parallel>], iteration_bounds = array<i64: 1>, scalar_prefetch = 0 : i64, scratch_operands = 0 : i64, tpu.core_type = #tpu.core_type<tc>, window_params = [{transform_indices = @transform_0, window_bounds = array<i64: 16, 32>}, {pipeline_mode = #tpu.pipeline_mode<synchronous>, transform_indices = @transform_1, window_bounds = array<i64: 32, 4>}, {pipeline_mode = #tpu.pipeline_mode<synchronous>, transform_indices = @transform_2, window_bounds = array<i64: 1, 4>}, {pipeline_mode = #tpu.pipeline_mode<synchronous>, transform_indices = @transform_3, window_bounds = array<i64: 1, 4>}, {transform_indices = @transform_4, window_bounds = array<i64: 1, 1>}, {transform_indices = @transform_5, window_bounds = array<i64: 2, 1>}]} {
    %c0 = arith.constant 0 : index
    %c0_0 = arith.constant 0 : index
    %0 = vector.load %arg1[%c0, %c0_0] : memref<16x32xf32, #tpu.memory_space<vmem>>, vector<16x32xf32>
    %c0_1 = arith.constant 0 : index
    %c0_2 = arith.constant 0 : index
    %1 = vector.load %arg2[%c0_1, %c0_2] : memref<32x4xf32, #tpu.memory_space<vmem>>, vector<32x4xf32>
    %cst = arith.constant dense<0.000000e+00> : vector<16x4xf32>
    %2 = tpu.matmul %0, %1, %cst {dimension_numbers = #tpu.dot_dimension_numbers<[1], [0], [0], [1], [0, 0, 1, 1], [], []>} : vector<16x32xf32>, vector<32x4xf32>, vector<16x4xf32> -> vector<16x4xf32>
    %c0_3 = arith.constant 0 : index
    %c0_4 = arith.constant 0 : index
    %3 = vector.load %arg3[%c0_3, %c0_4] : memref<1x4xf32, #tpu.memory_space<vmem>>, vector<1x4xf32>
    %4 = vector.broadcast %3 : vector<1x4xf32> to vector<16x4xf32>
    %5 = arith.addf %2, %4 : vector<16x4xf32>
    %cst_5 = arith.constant dense<0xFF800000> : vector<16xf32>
    %6 = vector.multi_reduction <maximumf>, %5, %cst_5 [1] : vector<16x4xf32> to vector<16xf32>
    %7 = vector.shape_cast %6 : vector<16xf32> to vector<16x1xf32>
    %8 = vector.broadcast %7 : vector<16x1xf32> to vector<16x4xf32>
    %9 = arith.subf %5, %8 : vector<16x4xf32>
    %10 = math.exp %9 : vector<16x4xf32>
    %cst_6 = arith.constant dense<0.000000e+00> : vector<16xf32>
    %11 = vector.multi_reduction <add>, %10, %cst_6 [1] : vector<16x4xf32> to vector<16xf32>
    %12 = vector.shape_cast %11 : vector<16xf32> to vector<16x1xf32>
    %13 = tpu.reciprocal %12 {approx = true} : vector<16x1xf32> -> vector<16x1xf32>
    %14 = vector.broadcast %13 : vector<16x1xf32> to vector<16x4xf32>
    %15 = arith.mulf %10, %14 : vector<16x4xf32>
    %16 = vector.shape_cast %15 : vector<16x4xf32> to vector<2x8x4xf32>
    %cst_7 = arith.constant dense<0.000000e+00> : vector<2x4xf32>
    %17 = vector.multi_reduction <add>, %16, %cst_7 [1] : vector<2x8x4xf32> to vector<2x4xf32>
    %c0_8 = arith.constant 0 : index
    %c0_9 = arith.constant 0 : index
    %18 = vector.load %arg4[%c0_8, %c0_9] : memref<1x4xf32, #tpu.memory_space<vmem>>, vector<1x4xf32>
    %19 = vector.broadcast %18 : vector<1x4xf32> to vector<2x4xf32>
    %20 = arith.mulf %17, %19 : vector<2x4xf32>
    %cst_10 = arith.constant dense<0.000000e+00> : vector<2xf32>
    %21 = vector.multi_reduction <add>, %20, %cst_10 [1] : vector<2x4xf32> to vector<2xf32>
    %22 = vector.shape_cast %21 : vector<2xf32> to vector<2x1xf32>
    %c0_11 = arith.constant 0 : index
    %c0_12 = arith.constant 0 : index
    %23 = memref.load %arg5[%c0_11, %c0_12] : memref<1x1xf32, #tpu.memory_space<smem>>
    %24 = vector.broadcast %23 : f32 to vector<2x1xf32>
    %25 = arith.addf %22, %24 : vector<2x1xf32>
    %c0_13 = arith.constant 0 : index
    %c0_14 = arith.constant 0 : index
    %26 = vector.load %arg6[%c0_13, %c0_14] : memref<2x1xf32, #tpu.memory_space<vmem>>, vector<2x1xf32>
    tpu.vector_store %arg6[%c0_13, %c0_14], %25 {strides = array<i32>} : memref<2x1xf32, #tpu.memory_space<vmem>>, vector<2x1xf32>,
    return
  }
  func.func @transform_0(%arg0: i32) -> (i32, i32) {
    %c0_i32 = arith.constant 0 : i32
    %c0_i32_0 = arith.constant 0 : i32
    return %arg0, %c0_i32 : i32, i32
  }
  func.func @transform_1(%arg0: i32) -> (i32, i32) {
    %c0_i32 = arith.constant 0 : i32
    %c0_i32_0 = arith.constant 0 : i32
    %c0_i32_1 = arith.constant 0 : i32
    return %c0_i32, %c0_i32_0 : i32, i32
  }
  func.func @transform_2(%arg0: i32) -> (i32, i32) {
    %c0_i32 = arith.constant 0 : i32
    %c0_i32_0 = arith.constant 0 : i32
    %c0_i32_1 = arith.constant 0 : i32
    return %c0_i32, %c0_i32_0 : i32, i32
  }
  func.func @transform_3(%arg0: i32) -> (i32, i32) {
    %c0_i32 = arith.constant 0 : i32
    %c0_i32_0 = arith.constant 0 : i32
    %c0_i32_1 = arith.constant 0 : i32
    return %c0_i32, %c0_i32_0 : i32, i32
  }
  func.func @transform_4(%arg0: i32) -> (i32, i32) {
    %c0_i32 = arith.constant 0 : i32
    %c0_i32_0 = arith.constant 0 : i32
    %c0_i32_1 = arith.constant 0 : i32
    return %c0_i32, %c0_i32_0 : i32, i32
  }
  func.func @transform_5(%arg0: i32) -> (i32, i32) {
    %c0_i32 = arith.constant 0 : i32
    %c0_i32_0 = arith.constant 0 : i32
    return %arg0, %c0_i32 : i32, i32
  }
}

</mosaic_0001>

<llo_original>
// kernel: tpu_custom_call.1
$region0: #{tpu_custom_call.1}
  #allocation0 [shape = 'u32[]', space=smem, size = 0x4, offset = 0x4, fixed_abs, tag = 'smem constant byte address 0x4 - core index']
  #allocation1 [shape = 'u32[144,128]{1,0:T(1,128)}', space=vmem, size = 0x12000, scoped, tag = 'internal scratch']
  #allocation2 [shape = 'f32[1,1]{1,0:T(1,128)S(6)}', space=smem, size = 0x200, scoped, tag = 'scoped memory for tpu_custom_call.1']
  %s0 = inlined_call_operand.vmem [shape: f32[16,32], index: 0, kind: input, shape index: {}]
  %s1 = inlined_call_operand.vmem [shape: f32[32,4], index: 1, kind: input, shape index: {}]
  %s2 = inlined_call_operand.vmem [shape: f32[1,4], index: 2, kind: input, shape index: {}]
  %s3 = inlined_call_operand.vmem [shape: f32[1,4], index: 3, kind: input, shape index: {}]
  %s4 = inlined_call_operand.<no memory space> [shape: f32[1,1], index: 4, kind: input, shape index: {}]
  %s5 = inlined_call_operand.vmem [shape: f32[2,1], index: 5, kind: output, shape index: {}]
  %s6 = sld [smem:[#allocation0]]
  $region30: #{tpu_custom_call.1} parent=0
    _
  %s8 = ssub.s32 1, %s6
  %s9 = scalar_select 0, %s8, %s6
  %10 = sst [smem:[#allocation2]] %s4
  // Predicated region
  $region2: #{tpu_custom_call.1} parent=0 // pred_check
    _
  $region3: #{tpu_custom_call.1} parent=0 // pred_check_branch
    %12 = sbr.rel (0) target = $region5
  $region4: #{tpu_custom_call.1} parent=0 // pred_region
    _
  $region5: #{tpu_custom_call.1} parent=0 // pred_fallthru
    _
  // Predicated region
  $region6: #{tpu_custom_call.1} parent=0 // pred_check
    _
  $region7: #{tpu_custom_call.1} parent=0 // pred_check_branch
    %14 = sbr.rel (0) target = $region9
  $region8: #{tpu_custom_call.1} parent=0 // pred_region
    _
  $region9: #{tpu_custom_call.1} parent=0 // pred_fallthru
    _
  // Predicated region
  $region10: #{tpu_custom_call.1} parent=0 // pred_check
    _
  $region11: #{tpu_custom_call.1} parent=0 // pred_check_branch
    %16 = sbr.rel (0) target = $region13
  $region12: #{tpu_custom_call.1} parent=0 // pred_region
    _
  $region13: #{tpu_custom_call.1} parent=0 // pred_fallthru
    _
  // Predicated region
  $region14: #{tpu_custom_call.1} parent=0 // pred_check
    _
  $region15: #{tpu_custom_call.1} parent=0 // pred_check_branch
    %18 = sbr.rel (0) target = $region17
  $region16: #{tpu_custom_call.1} parent=0 // pred_region
    _
  $region17: #{tpu_custom_call.1} parent=0 // pred_fallthru
    _
  // Predicated region
  $region18: #{tpu_custom_call.1} parent=0 // pred_check
    _
  $region19: #{tpu_custom_call.1} parent=0 // pred_check_branch
    %20 = sbr.rel (0) target = $region21
  $region20: #{tpu_custom_call.1} parent=0 // pred_region
    _
  $region21: #{tpu_custom_call.1} parent=0 // pred_fallthru
    _
  %v21 = vld [vmem:[%s0] sm:$0xff]
  %v22 = vld [vmem:[%s0 + $0x8] sm:$0xff]
  %v23 = vld [vmem:[%s1] sm:$0xff]
  %v24 = vld [vmem:[%s1 + $0x8] sm:$0xff]
  %v25 = vld [vmem:[%s1 + $0x10] sm:$0xff]
  %v26 = vld [vmem:[%s1 + $0x18] sm:$0xff]
  %v27 = vld [vmem:[%s2] sm:$0x1]
  %v29 = vlaneseq
  %v30 = vshrl.u32 %v29, 7
  %v31 = vsub.s32 0, %v30
  %v32 = vrot.slane %v27, %v31
  %vm34 = vcmask 261120
  %v36 = vsel %vm34, %v21, 0
  %v39 = vsel %vm34, %v22, 0
  %41 = vmatprep.subr.mxu0 0.0
  %42 = vmatpush1.msra.mxu0 0.0
  %43 = vmatprep.subr.mxu0 0.0
  %44 = vmatpush1.msra.mxu0 0.0
  %45 = vmatprep.subr.mxu0 0.0
  %46 = vmatpush1.msra.mxu0 0.0
  %47 = vmatprep.subr.mxu0 0.0
  %48 = vmatpush1.msra.mxu0 0.0
  %49 = vmatprep.subr.mxu0 0.0
  %50 = vmatpush1.msra.mxu0 0.0
  %51 = vmatprep.subr.mxu0 0.0
  %52 = vmatpush1.msra.mxu0 0.0
  %53 = vmatprep.subr.mxu0 0.0
  %54 = vmatpush1.msra.mxu0 0.0
  %55 = vmatprep.subr.mxu0 0.0
  %56 = vmatpush1.msra.mxu0 0.0
  %57 = vmatprep.subr.mxu0 0.0
  %58 = vmatpush1.msra.mxu0 0.0
  %59 = vmatprep.subr.mxu0 0.0
  %60 = vmatpush1.msra.mxu0 0.0
  %61 = vmatprep.subr.mxu0 0.0
  %62 = vmatpush1.msra.mxu0 0.0
  %63 = vmatprep.subr.mxu0 0.0
  %64 = vmatpush1.msra.mxu0 0.0
  %65 = vmatprep.subr.mxu0 0.0
  %66 = vmatpush1.msra.mxu0 %v26
  %67 = vmatprep.subr.mxu0 0.0
  %68 = vmatpush1.msra.mxu0 %v25
  %69 = vmatprep.subr.mxu0 0.0
  %70 = vmatpush1.msra.mxu0 %v24
  %71 = vmatprep.subr.mxu0 0.0
  %72 = vmatpush1.msra.mxu0 %v23
  %73 = vmatprep.subr.mxu0 0.0
  %74 = vmatpush2.msra.mxu0 0.0
  %75 = vmatprep.subr.mxu0 0.0
  %76 = vmatpush2.msra.mxu0 0.0
  %77 = vmatprep.subr.mxu0 0.0
  %78 = vmatpush2.msra.mxu0 0.0
  %79 = vmatprep.subr.mxu0 0.0
  %80 = vmatpush2.msra.mxu0 0.0
  %81 = vmatprep.subr.mxu0 0.0
  %82 = vmatpush2.msra.mxu0 0.0
  %83 = vmatprep.subr.mxu0 0.0
  %84 = vmatpush2.msra.mxu0 0.0
  %85 = vmatprep.subr.mxu0 0.0
  %86 = vmatpush2.msra.mxu0 0.0
  %87 = vmatprep.subr.mxu0 0.0
  %88 = vmatpush2.msra.mxu0 0.0
  %89 = vmatprep.subr.mxu0 0.0
  %90 = vmatpush2.msra.mxu0 0.0
  %91 = vmatprep.subr.mxu0 0.0
  %92 = vmatpush2.msra.mxu0 0.0
  %93 = vmatprep.subr.mxu0 0.0
  %94 = vmatpush2.msra.mxu0 0.0
  %95 = vmatprep.subr.mxu0 0.0
  %96 = vmatpush2.msra.mxu0 0.0
  %97 = vmatprep.subr.mxu0 0.0
  %98 = vmatpush2.msra.mxu0 0.0
  %99 = vmatprep.subr.mxu0 0.0
  %100 = vmatpush2.msra.mxu0 0.0
  %101 = vmatprep.subr.mxu0 0.0
  %102 = vmatpush2.msra.mxu0 0.0
  %103 = vmatprep.subr.mxu0 0.0
  %104 = vmatpush2.msra.mxu0 0.0
  %105 = vmatprep.mubr.f32.mxu0 0.0
  %106 = vmatmul.mubr.f32.gmra.mxu0 %v36
  %v107 = vpop.f32.mrf.mxu0
  %v108 = vadd.f32 %v32, %v107
  %v109 = vpop.f32.mrf.mxu0
  %110 = vmatprep.mubr.f32.mxu0 0.0
  %111 = vmatmul.mubr.f32.gmra.mxu0 %v39
  %v112 = vpop.f32.mrf.mxu0
  %v113 = vadd.f32 %v32, %v112
  %v114 = vpop.f32.mrf.mxu0
  %115 = vdwg.mxu0
  %vm116 = vcmask 31744
  %v117 = vsel %vm116, %v108, -inf
  %118 = vmax.xlane.f32.xlu0 %v117
  %v119 = vpop.xlane.xlu0 %118
  %v120 = vsel %vm116, %v113, -inf
  %121 = vmax.xlane.f32.xlu0 %v120
  %v122 = vpop.xlane.xlu0 %121
  %v123 = vsub.f32 %v108, %v119
  %v124 = vsub.f32 %v113, %v122
  %v125 = vmul.f32 %v123, 1.442695
  %v126 = vpow.pop %v125
  %v127 = vmul.f32 %v124, 1.442695
  %v128 = vpow.pop %v127
  %v129 = vsel %vm116, %v126, 0.0
  %130 = vadd.xlane.f32.xlu0 %v129
  %v131 = vpop.xlane.xlu0 %130
  %v132 = vsel %vm116, %v128, 0.0
  %133 = vadd.xlane.f32.xlu0 %v132
  %v134 = vpop.xlane.xlu0 %133
  %v135 = vrcp.pop %v131
  %v136 = vrcp.pop %v134
  %v137 = vmul.f32 %v126, %v135
  %v138 = vmul.f32 %v128, %v136
  %v139 = vsel %vm116, %v137, 0.0
  %v140 = vrot.slane %v139, 4
  %v141 = vadd.f32 %v139, %v140
  %v142 = vrot.slane %v141, 2
  %v143 = vadd.f32 %v141, %v142
  %v144 = vrot.slane %v143, 1
  %v145 = vadd.f32 %v143, %v144
  %v146 = vsel %vm116, %v138, 0.0
  %v147 = vrot.slane %v146, 4
  %v148 = vadd.f32 %v146, %v147
  %v149 = vrot.slane %v148, 2
  %v150 = vadd.f32 %v148, %v149
  %v151 = vrot.slane %v150, 1
  %v152 = vadd.f32 %v150, %v151
  %v153 = vld [vmem:[%s3] sm:$0x1]
  %v155 = vlaneseq
  %v156 = vshrl.u32 %v155, 7
  %v157 = vsub.s32 0, %v156
  %v158 = vrot.slane %v153, %v157
  %v160 = vmul.f32 %v145, %v158
  %v161 = vmul.f32 %v152, %v158
  %v164 = vrot.slane %v161, 7
  %vm165 = vcmask 1041409
  %v166 = vsel %vm165, %v164, %v160
  %vm168 = vcmask 25600
  %v169 = vsel %vm168, %v166, 0.0
  %170 = vadd.xlane.f32.xlu0 %v169
  %v171 = vpop.xlane.xlu0 %170
  %s172 = sld [smem:[#allocation2]]
  %v173 = vstv %s172
  %v174 = vadd.f32 %v171, %v173
  %vm175 = vcmask 1024
  %176 = vst.msk [vmem:[%s5] sm:$0x3] %vm175, %v174
  // Predicated region
  $region22: #{tpu_custom_call.1} parent=0 // pred_check
    _
  $region23: #{tpu_custom_call.1} parent=0 // pred_check_branch
    %178 = sbr.rel (0) target = $region25
  $region24: #{tpu_custom_call.1} parent=0 // pred_region
    _
  $region25: #{tpu_custom_call.1} parent=0 // pred_fallthru
    _
  // Predicated region
  $region26: #{tpu_custom_call.1} parent=0 // pred_check
    _
  $region27: #{tpu_custom_call.1} parent=0 // pred_check_branch
    %180 = sbr.rel (0) target = $region29
  $region28: #{tpu_custom_call.1} parent=0 // pred_region
    _
  $region29: #{tpu_custom_call.1} parent=0 // pred_fallthru
    _

</llo_original>
